<compile_context>
chip_gen: v5e
topology: v5e:2x2
jax: 0.10.0
libtpu: 0.0.40
codegen_flags: <defaults>
</compile_context>

<pallas_src>
import functools
import operator

import jax
import jax.numpy as jnp
import numpy as np
from jax import lax
from jax.experimental import pallas as pl
from jax.experimental.pallas import tpu as pltpu

HEAD_PAD = 128           # fused head lanes: [logits | baseline | action | zeros]
MiB = 1024 * 1024

_SINGLE_BUFFER_OK = None  # cached: does this JAX accept pipeline_mode=pl.Buffered(1)?


def _round_up(x, m):
    return (x + m - 1) // m * m


def _net_kernel(x_ref, r_ref,
                w1_ref, b1_ref, w2_ref, b2_ref,
                wh_ref, whr_ref, bh_ref,
                out_ref, *, num_actions):
    # fc1 + relu (frame cast to bf16 in-kernel; f32 accumulation on the MXU)
    x = x_ref[...].astype(jnp.bfloat16)
    h1 = jnp.dot(x, w1_ref[...], preferred_element_type=jnp.float32)
    h1 = jnp.maximum(h1 + b1_ref[...], 0.0)

    # fc2 + relu
    h2 = jnp.dot(h1.astype(jnp.bfloat16), w2_ref[...],
                 preferred_element_type=jnp.float32)
    h2 = jnp.maximum(h2 + b2_ref[...], 0.0)

    # clipped reward (the "+1" concat feature), exact split-weight formulation:
    #   head([h2, r]) = h2 @ Wh + r * Wh_r + bh
    r = jnp.clip(r_ref[...], -1.0, 1.0)                               # [tile_n, 1]
    head = (jnp.dot(h2.astype(jnp.bfloat16), wh_ref[...],
                    preferred_element_type=jnp.float32)
            + r * whr_ref[...] + bh_ref[...])                          # [tile_n, 128]

    # argmax over the real action columns (first-index tie-break like torch.argmax)
    col = lax.broadcasted_iota(jnp.int32, head.shape, 1)
    valid = col < num_actions
    masked = jnp.where(valid, head, -jnp.inf)
    max_val = jnp.max(masked, axis=-1, keepdims=True)
    idx = jnp.where(valid & (head == max_val), col, HEAD_PAD)
    action = jnp.min(idx, axis=-1, keepdims=True)                      # int32 [tile_n,1]
    action_f = action.astype(jnp.float32)                              # exact small ints

    # Lane-dense packed slab: [logits | baseline | action | zeros], stored bf16.
    out = jnp.where(col == num_actions + 1, action_f, head)
    out_ref[...] = out.astype(out_ref.dtype)
    # TODO(synk): training-mode multinomial sampling (torch.multinomial) is not
    # implemented; eval-mode argmax is used (matches self.training == False).


def prepare_params(params):
    """One-time packing: fuse policy+baseline heads into a 128-lane slab, cast matmul
    weights to bf16. Call once at load time, NOT per forward call."""
    H = params["w1"].shape[1]
    A = params["wp"].shape[1]
    assert A + 2 <= HEAD_PAD, "num_actions must fit the 128-lane fused head slab"

    wh = jnp.zeros((H, HEAD_PAD), jnp.float32)
    wh = wh.at[:, :A].set(params["wp"]).at[:, A:A + 1].set(params["wb"])
    whr = jnp.zeros((1, HEAD_PAD), jnp.float32)
    whr = whr.at[:, :A].set(params["wpr"]).at[:, A:A + 1].set(params["wbr"])
    bh = jnp.zeros((1, HEAD_PAD), jnp.float32)
    bh = bh.at[:, :A].set(params["bp"]).at[:, A:A + 1].set(params["bb"])

    return dict(
        w1=params["w1"].astype(jnp.bfloat16),
        b1=params["b1"].astype(jnp.float32),
        w2=params["w2"].astype(jnp.bfloat16),
        b2=params["b2"].astype(jnp.float32),
        wh=wh.astype(jnp.bfloat16),
        whr=whr,
        bh=bh,
        num_actions=int(A),
    )


def _vmem_capacity_bytes():
    try:
        info = pltpu.get_tpu_info()
        for name in ("vmem_capacity_bytes", "vmem_size_bytes", "vmem_bytes"):
            cap = getattr(info, name, None)
            if cap:
                return int(cap)
    except Exception:
        pass
    return 64 * MiB  # conservative default (v7x-sized)


def _padded_vmem_bytes(arr):
    r, c = arr.shape
    sub = 16 if arr.dtype == jnp.bfloat16 else 8
    return _round_up(r, sub) * _round_up(c, 128) * arr.dtype.itemsize


def _run_pallas(x, r, p, *, tile_n, grid, vmem_limit, cost, single_buffer):
    D = x.shape[1]
    A = p["num_actions"]

    def resident(shape):
        if single_buffer:
            return pl.BlockSpec(shape, lambda i: (0, 0), pipeline_mode=pl.Buffered(1))
        return pl.BlockSpec(shape, lambda i: (0, 0))

    in_specs = [
        pl.BlockSpec((tile_n, D), lambda i: (i, 0)),     # streamed frame rows (f32)
        pl.BlockSpec((tile_n, 1), lambda i: (i, 0)),     # streamed rewards
        resident(p["w1"].shape), resident(p["b1"].shape),
        resident(p["w2"].shape), resident(p["b2"].shape),
        resident(p["wh"].shape), resident(p["whr"].shape), resident(p["bh"].shape),
    ]
    out_specs = pl.BlockSpec((tile_n, HEAD_PAD), lambda i: (i, 0))

    n_rows = grid[0] * tile_n  # logical row extent covered by the grid
    return pl.pallas_call(
        functools.partial(_net_kernel, num_actions=A),
        out_shape=jax.ShapeDtypeStruct((x.shape[0], HEAD_PAD), jnp.bfloat16),
        grid_spec=pltpu.PrefetchScalarGridSpec(
            num_scalar_prefetch=0,
            grid=grid,
            in_specs=in_specs,
            out_specs=out_specs,
        ),
        compiler_params=pltpu.CompilerParams(
            dimension_semantics=("parallel",),            # megacore sharding on v7x
            vmem_limit_bytes=vmem_limit,
        ),
        cost_estimate=cost,
    )(x, r, p["w1"], p["b1"], p["w2"], p["b2"], p["wh"], p["whr"], p["bh"])


def net_forward(frame, reward, packed, *, tile_n=None):
    """frame: [T, B, *obs_shape] f32, reward: [T, B] f32, packed = prepare_params(...)."""
    global _SINGLE_BUFFER_OK
    T, B = frame.shape[0], frame.shape[1]
    N = T * B
    D = functools.reduce(operator.mul, frame.shape[2:], 1)
    A = packed["num_actions"]

    # Reshapes only (no cast, no pad): the frame streams to the kernel in f32.
    x = frame.reshape(N, D)
    r = reward.reshape(N, 1).astype(jnp.float32)

    weights = [packed[k] for k in ("w1", "b1", "w2", "b2", "wh", "whr", "bh")]
    weight_vmem = sum(_padded_vmem_bytes(w) for w in weights)
    weight_hbm = sum(int(np.prod(w.shape)) * w.dtype.itemsize for w in weights)

    # Generation-aware tile / VMEM budgets.
    vmem_cap = _vmem_capacity_bytes()
    small_vmem = vmem_cap <= 80 * MiB            # v7x (64 MiB/TC) vs v5e/v6e (128 MiB)
    limit_cap = (48 if small_vmem else 96) * MiB
    tile_cap = 1024 if small_vmem else 2048
    stream_budget = max(4 * MiB, (16 if small_vmem else 32) * MiB - 2 * weight_vmem)

    # Double-buffered per-row VMEM: x (f32, lane-padded), reward (lane-padded to 128),
    # output slab (bf16, 128 lanes).
    d_pad = _round_up(D, 128)
    per_row = 2 * d_pad * 4 + 2 * 128 * 4 + 2 * HEAD_PAD * 2

    if tile_n is None:
        tile_n = stream_budget // per_row
        tile_n = max(8, min(tile_cap, (tile_n // 8) * 8))
    # Never allocate a tile (much) larger than the whole problem.
    if N <= tile_n:
        tile_n = N if N % 8 == 0 else _round_up(N, 8)
    # Megacore-awareness: ensure >= 2 grid steps when there is enough work to split.
    if pl.cdiv(N, tile_n) < 2 and N >= 16:
        tile_n = max(8, _round_up(pl.cdiv(N, 2), 8))
    grid = (pl.cdiv(N, tile_n),)

    flops = 2 * N * (D * weights[0].shape[1] + weights[2].shape[0] * weights[2].shape[1]
                     + weights[4].shape[0] * HEAD_PAD)
    bytes_accessed = N * (D * 4 + 4 + HEAD_PAD * 2) + weight_hbm
    cost = pl.CostEstimate(flops=flops, transcendentals=0, bytes_accessed=bytes_accessed)

    vmem_est = tile_n * per_row + 2 * weight_vmem + 1 * MiB
    vmem_limit = int(min(limit_cap, max(16 * MiB, int(1.25 * vmem_est))))

    run = functools.partial(_run_pallas, x, r, packed, tile_n=tile_n, grid=grid,
                            vmem_limit=vmem_limit, cost=cost)

    if _SINGLE_BUFFER_OK is None:
        _SINGLE_BUFFER_OK = hasattr(pl, "Buffered")
    if _SINGLE_BUFFER_OK:
        try:
            out = jax.block_until_ready(run(single_buffer=True))
        except Exception:
            _SINGLE_BUFFER_OK = False
            out = run(single_buffer=False)
    else:
        out = run(single_buffer=False)

    out = out[:N]
    policy_logits = out[:, :A].astype(jnp.float32).reshape(T, B, A)
    baseline = out[:, A].astype(jnp.float32).reshape(T, B)
    action = out[:, A + 1].astype(jnp.int32).reshape(T, B)
    core_state = tuple()  # use_lstm=False -> empty core state
    # TODO(synk): use_lstm=True (nn.LSTM core with done-masked unroll) not implemented.
    return (action, policy_logits, baseline), core_state


def init_params(key, input_size, hidden_size, num_actions):
    """PyTorch-Linear-style init (uniform +-1/sqrt(fan_in)); weights stored [in, out].

    Policy/baseline weights are split into the hidden part and the reward column so
    the reward-concat is computed exactly without a lane-axis concat.
    """
    ks = jax.random.split(key, 4)

    def lin(k, fan_in, fan_out):
        kw, kb = jax.random.split(k)
        bound = 1.0 / jnp.sqrt(fan_in)
        w = jax.random.uniform(kw, (fan_in, fan_out), jnp.float32, -bound, bound)
        b = jax.random.uniform(kb, (1, fan_out), jnp.float32, -bound, bound)
        return w, b

    core = hidden_size + 1
    w1, b1 = lin(ks[0], input_size, hidden_size)
    w2, b2 = lin(ks[1], hidden_size, hidden_size)
    wp_full, bp = lin(ks[2], core, num_actions)
    wb_full, bb = lin(ks[3], core, 1)
    return dict(
        w1=w1, b1=b1, w2=w2, b2=b2,
        wp=wp_full[:hidden_size], wpr=wp_full[hidden_size:], bp=bp,
        wb=wb_full[:hidden_size], wbr=wb_full[hidden_size:], bb=bb,
    )


def _reference_forward(frame, reward, params):
    """Pure-JAX f32 reference for validation."""
    T, B = frame.shape[0], frame.shape[1]
    N = T * B
    D = functools.reduce(operator.mul, frame.shape[2:], 1)
    x = frame.reshape(N, D).astype(jnp.float32)
    h1 = jnp.maximum(x @ params["w1"] + params["b1"], 0.0)
    h2 = jnp.maximum(h1 @ params["w2"] + params["b2"], 0.0)
    r = jnp.clip(reward.reshape(N, 1), -1.0, 1.0)
    logits = h2 @ params["wp"] + r * params["wpr"] + params["bp"]
    baseline = h2 @ params["wb"] + r * params["wbr"] + params["bb"]
    A = logits.shape[-1]
    return logits.reshape(T, B, A), baseline.reshape(T, B)


if __name__ == "__main__":
    T, B = 4, 2
    obs_shape = (4, 4, 4)          # input_size = 64
    hidden_size = 32
    num_actions = 8

    key = jax.random.PRNGKey(0)
    k_frame, k_reward, k_params = jax.random.split(key, 3)

    frame = jax.random.normal(k_frame, (T, B) + obs_shape, jnp.float32)
    reward = jax.random.normal(k_reward, (T, B), jnp.float32) * 2.0  # exercises clamp

    input_size = functools.reduce(operator.mul, obs_shape, 1)
    params = init_params(k_params, input_size, hidden_size, num_actions)
    packed = prepare_params(params)   # one-time packing, hoisted out of the forward

    (action, policy_logits, baseline), core_state = net_forward(frame, reward, packed)
    jax.block_until_ready((action, policy_logits, baseline))

    assert action.shape == (T, B) and action.dtype == jnp.int32
    assert policy_logits.shape == (T, B, num_actions)
    assert baseline.shape == (T, B)
    assert core_state == tuple()

    # Loose tolerance vs. f32 reference (bf16 weights + bf16 output slab, f32 accum).
    ref_logits, ref_baseline = _reference_forward(frame, reward, params)
    np.testing.assert_allclose(np.asarray(policy_logits), np.asarray(ref_logits),
                               rtol=0.1, atol=0.1)
    np.testing.assert_allclose(np.asarray(baseline), np.asarray(ref_baseline),
                               rtol=0.1, atol=0.1)
    ref_action = np.argmax(np.asarray(ref_logits).reshape(T * B, num_actions), axis=-1)
    np.testing.assert_array_equal(np.asarray(action).reshape(-1), ref_action)
    assert int(jnp.min(action)) >= 0 and int(jnp.max(action)) < num_actions

    print("KERNEL_OK")
</pallas_src>

<mosaic_0001>
module attributes {stable_mosaic.version = 11 : i64} {
  func.func @_net_kernel(%arg0: i32, %arg1: memref<8x64xf32, #tpu.memory_space<vmem>>, %arg2: memref<8x1xf32, #tpu.memory_space<vmem>>, %arg3: memref<64x32xbf16, #tpu.memory_space<vmem>>, %arg4: memref<1x32xf32, #tpu.memory_space<vmem>>, %arg5: memref<32x32xbf16, #tpu.memory_space<vmem>>, %arg6: memref<1x32xf32, #tpu.memory_space<vmem>>, %arg7: memref<32x128xbf16, #tpu.memory_space<vmem>>, %arg8: memref<1x128xf32, #tpu.memory_space<vmem>>, %arg9: memref<1x128xf32, #tpu.memory_space<vmem>>, %arg10: memref<8x128xbf16, #tpu.memory_space<vmem>>) attributes {dimension_semantics = [#tpu.dimension_semantics<parallel>], iteration_bounds = array<i64: 1>, scalar_prefetch = 0 : i64, scratch_operands = 0 : i64, tpu.core_type = #tpu.core_type<tc>, window_params = [{transform_indices = @transform_0, window_bounds = array<i64: 8, 64>}, {transform_indices = @transform_1, window_bounds = array<i64: 8, 1>}, {pipeline_mode = #tpu.pipeline_mode<synchronous>, transform_indices = @transform_2, window_bounds = array<i64: 64, 32>}, {pipeline_mode = #tpu.pipeline_mode<synchronous>, transform_indices = @transform_3, window_bounds = array<i64: 1, 32>}, {pipeline_mode = #tpu.pipeline_mode<synchronous>, transform_indices = @transform_4, window_bounds = array<i64: 32, 32>}, {pipeline_mode = #tpu.pipeline_mode<synchronous>, transform_indices = @transform_5, window_bounds = array<i64: 1, 32>}, {pipeline_mode = #tpu.pipeline_mode<synchronous>, transform_indices = @transform_6, window_bounds = array<i64: 32, 128>}, {pipeline_mode = #tpu.pipeline_mode<synchronous>, transform_indices = @transform_7, window_bounds = array<i64: 1, 128>}, {pipeline_mode = #tpu.pipeline_mode<synchronous>, transform_indices = @transform_8, window_bounds = array<i64: 1, 128>}, {transform_indices = @transform_9, window_bounds = array<i64: 8, 128>}]} {
    %c0 = arith.constant 0 : index
    %c0_0 = arith.constant 0 : index
    %0 = vector.load %arg1[%c0, %c0_0] : memref<8x64xf32, #tpu.memory_space<vmem>>, vector<8x64xf32>
    %1 = arith.truncf %0 : vector<8x64xf32> to vector<8x64xbf16>
    %c0_1 = arith.constant 0 : index
    %c0_2 = arith.constant 0 : index
    %2 = vector.load %arg3[%c0_1, %c0_2] : memref<64x32xbf16, #tpu.memory_space<vmem>>, vector<64x32xbf16>
    %cst = arith.constant dense<0.000000e+00> : vector<8x32xf32>
    %3 = tpu.matmul %1, %2, %cst {dimension_numbers = #tpu.dot_dimension_numbers<[1], [0], [0], [1], [0, 0, 1, 1], [], []>} : vector<8x64xbf16>, vector<64x32xbf16>, vector<8x32xf32> -> vector<8x32xf32>
    %c0_3 = arith.constant 0 : index
    %c0_4 = arith.constant 0 : index
    %4 = vector.load %arg4[%c0_3, %c0_4] : memref<1x32xf32, #tpu.memory_space<vmem>>, vector<1x32xf32>
    %5 = vector.broadcast %4 : vector<1x32xf32> to vector<8x32xf32>
    %6 = arith.addf %3, %5 : vector<8x32xf32>
    %cst_5 = arith.constant 0.000000e+00 : f32
    %7 = vector.broadcast %cst_5 : f32 to vector<8x32xf32>
    %8 = arith.maximumf %6, %7 : vector<8x32xf32>
    %9 = arith.truncf %8 : vector<8x32xf32> to vector<8x32xbf16>
    %c0_6 = arith.constant 0 : index
    %c0_7 = arith.constant 0 : index
    %10 = vector.load %arg5[%c0_6, %c0_7] : memref<32x32xbf16, #tpu.memory_space<vmem>>, vector<32x32xbf16>
    %cst_8 = arith.constant dense<0.000000e+00> : vector<8x32xf32>
    %11 = tpu.matmul %9, %10, %cst_8 {dimension_numbers = #tpu.dot_dimension_numbers<[1], [0], [0], [1], [0, 0, 1, 1], [], []>} : vector<8x32xbf16>, vector<32x32xbf16>, vector<8x32xf32> -> vector<8x32xf32>
    %c0_9 = arith.constant 0 : index
    %c0_10 = arith.constant 0 : index
    %12 = vector.load %arg6[%c0_9, %c0_10] : memref<1x32xf32, #tpu.memory_space<vmem>>, vector<1x32xf32>
    %13 = vector.broadcast %12 : vector<1x32xf32> to vector<8x32xf32>
    %14 = arith.addf %11, %13 : vector<8x32xf32>
    %cst_11 = arith.constant 0.000000e+00 : f32
    %15 = vector.broadcast %cst_11 : f32 to vector<8x32xf32>
    %16 = arith.maximumf %14, %15 : vector<8x32xf32>
    %c0_12 = arith.constant 0 : index
    %c0_13 = arith.constant 0 : index
    %17 = vector.load %arg2[%c0_12, %c0_13] : memref<8x1xf32, #tpu.memory_space<vmem>>, vector<8x1xf32>
    %cst_14 = arith.constant -1.000000e+00 : f32
    %cst_15 = arith.constant 1.000000e+00 : f32
    %18 = vector.broadcast %cst_14 : f32 to vector<8x1xf32>
    %19 = arith.maximumf %18, %17 : vector<8x1xf32>
    %20 = vector.broadcast %cst_15 : f32 to vector<8x1xf32>
    %21 = arith.minimumf %20, %19 : vector<8x1xf32>
    %22 = arith.truncf %16 : vector<8x32xf32> to vector<8x32xbf16>
    %c0_16 = arith.constant 0 : index
    %c0_17 = arith.constant 0 : index
    %23 = vector.load %arg7[%c0_16, %c0_17] : memref<32x128xbf16, #tpu.memory_space<vmem>>, vector<32x128xbf16>
    %cst_18 = arith.constant dense<0.000000e+00> : vector<8x128xf32>
    %24 = tpu.matmul %22, %23, %cst_18 {dimension_numbers = #tpu.dot_dimension_numbers<[1], [0], [0], [1], [0, 0, 1, 1], [], []>} : vector<8x32xbf16>, vector<32x128xbf16>, vector<8x128xf32> -> vector<8x128xf32>
    %c0_19 = arith.constant 0 : index
    %c0_20 = arith.constant 0 : index
    %25 = vector.load %arg8[%c0_19, %c0_20] : memref<1x128xf32, #tpu.memory_space<vmem>>, vector<1x128xf32>
    %26 = vector.broadcast %21 : vector<8x1xf32> to vector<8x128xf32>
    %27 = vector.broadcast %25 : vector<1x128xf32> to vector<8x128xf32>
    %28 = arith.mulf %26, %27 : vector<8x128xf32>
    %29 = arith.addf %24, %28 : vector<8x128xf32>
    %c0_21 = arith.constant 0 : index
    %c0_22 = arith.constant 0 : index
    %30 = vector.load %arg9[%c0_21, %c0_22] : memref<1x128xf32, #tpu.memory_space<vmem>>, vector<1x128xf32>
    %31 = vector.broadcast %30 : vector<1x128xf32> to vector<8x128xf32>
    %32 = arith.addf %29, %31 : vector<8x128xf32>
    %33 = tpu.iota {dimensions = array<i32: 1>} : vector<8x128xi32>
    %c8_i32 = arith.constant 8 : i32
    %34 = vector.broadcast %c8_i32 : i32 to vector<8x128xi32>
    %35 = arith.cmpi slt, %33, %34 : vector<8x128xi32>
    %cst_23 = arith.constant 0xFF800000 : f32
    %36 = vector.broadcast %cst_23 : f32 to vector<8x128xf32>
    %37 = arith.select %35, %32, %36 : vector<8x128xi1>, vector<8x128xf32>
    %cst_24 = arith.constant dense<0xFF800000> : vector<8xf32>
    %38 = vector.multi_reduction <maximumf>, %37, %cst_24 [1] : vector<8x128xf32> to vector<8xf32>
    %39 = vector.shape_cast %38 : vector<8xf32> to vector<8x1xf32>
    %40 = vector.broadcast %39 : vector<8x1xf32> to vector<8x128xf32>
    %41 = arith.cmpf oeq, %32, %40 : vector<8x128xf32>
    %42 = arith.andi %35, %41 : vector<8x128xi1>
    %c128_i32 = arith.constant 128 : i32
    %43 = vector.broadcast %c128_i32 : i32 to vector<8x128xi32>
    %44 = arith.select %42, %33, %43 : vector<8x128xi1>, vector<8x128xi32>
    %cst_25 = arith.constant dense<2147483647> : vector<8xi32>
    %45 = vector.multi_reduction <minsi>, %44, %cst_25 [1] : vector<8x128xi32> to vector<8xi32>
    %46 = vector.shape_cast %45 : vector<8xi32> to vector<8x1xi32>
    %47 = arith.sitofp %46 : vector<8x1xi32> to vector<8x1xf32>
    %c9_i32 = arith.constant 9 : i32
    %48 = vector.broadcast %c9_i32 : i32 to vector<8x128xi32>
    %49 = arith.cmpi eq, %33, %48 : vector<8x128xi32>
    %50 = vector.shape_cast %47 : vector<8x1xf32> to vector<8x1xf32>
    %51 = vector.broadcast %50 : vector<8x1xf32> to vector<8x128xf32>
    %52 = arith.select %49, %51, %32 : vector<8x128xi1>, vector<8x128xf32>
    %53 = arith.truncf %52 : vector<8x128xf32> to vector<8x128xbf16>
    %c0_26 = arith.constant 0 : index
    %c0_27 = arith.constant 0 : index
    %54 = vector.load %arg10[%c0_26, %c0_27] : memref<8x128xbf16, #tpu.memory_space<vmem>>, vector<8x128xbf16>
    tpu.vector_store %arg10[%c0_26, %c0_27], %53 {strides = array<i32>} : memref<8x128xbf16, #tpu.memory_space<vmem>>, vector<8x128xbf16>,
    return
  }
  func.func @transform_0(%arg0: i32) -> (i32, i32) {
    %c0_i32 = arith.constant 0 : i32
    %c0_i32_0 = arith.constant 0 : i32
    return %arg0, %c0_i32 : i32, i32
  }
  func.func @transform_1(%arg0: i32) -> (i32, i32) {
    %c0_i32 = arith.constant 0 : i32
    %c0_i32_0 = arith.constant 0 : i32
    return %arg0, %c0_i32 : i32, i32
  }
  func.func @transform_2(%arg0: i32) -> (i32, i32) {
    %c0_i32 = arith.constant 0 : i32
    %c0_i32_0 = arith.constant 0 : i32
    %c0_i32_1 = arith.constant 0 : i32
    return %c0_i32, %c0_i32_0 : i32, i32
  }
  func.func @transform_3(%arg0: i32) -> (i32, i32) {
    %c0_i32 = arith.constant 0 : i32
    %c0_i32_0 = arith.constant 0 : i32
    %c0_i32_1 = arith.constant 0 : i32
    return %c0_i32, %c0_i32_0 : i32, i32
  }
  func.func @transform_4(%arg0: i32) -> (i32, i32) {
    %c0_i32 = arith.constant 0 : i32
    %c0_i32_0 = arith.constant 0 : i32
    %c0_i32_1 = arith.constant 0 : i32
    return %c0_i32, %c0_i32_0 : i32, i32
  }
  func.func @transform_5(%arg0: i32) -> (i32, i32) {
    %c0_i32 = arith.constant 0 : i32
    %c0_i32_0 = arith.constant 0 : i32
    %c0_i32_1 = arith.constant 0 : i32
    return %c0_i32, %c0_i32_0 : i32, i32
  }
  func.func @transform_6(%arg0: i32) -> (i32, i32) {
    %c0_i32 = arith.constant 0 : i32
    %c0_i32_0 = arith.constant 0 : i32
    %c0_i32_1 = arith.constant 0 : i32
    return %c0_i32, %c0_i32_0 : i32, i32
  }
  func.func @transform_7(%arg0: i32) -> (i32, i32) {
    %c0_i32 = arith.constant 0 : i32
    %c0_i32_0 = arith.constant 0 : i32
    %c0_i32_1 = arith.constant 0 : i32
    return %c0_i32, %c0_i32_0 : i32, i32
  }
  func.func @transform_8(%arg0: i32) -> (i32, i32) {
    %c0_i32 = arith.constant 0 : i32
    %c0_i32_0 = arith.constant 0 : i32
    %c0_i32_1 = arith.constant 0 : i32
    return %c0_i32, %c0_i32_0 : i32, i32
  }
  func.func @transform_9(%arg0: i32) -> (i32, i32) {
    %c0_i32 = arith.constant 0 : i32
    %c0_i32_0 = arith.constant 0 : i32
    return %arg0, %c0_i32 : i32, i32
  }
}

module attributes {stable_mosaic.version = 11 : i64} {
  func.func @_net_kernel(%arg0: i32, %arg1: memref<8x64xf32, #tpu.memory_space<vmem>>, %arg2: memref<8x1xf32, #tpu.memory_space<vmem>>, %arg3: memref<64x32xbf16, #tpu.memory_space<vmem>>, %arg4: memref<1x32xf32, #tpu.memory_space<vmem>>, %arg5: memref<32x32xbf16, #tpu.memory_space<vmem>>, %arg6: memref<1x32xf32, #tpu.memory_space<vmem>>, %arg7: memref<32x128xbf16, #tpu.memory_space<vmem>>, %arg8: memref<1x128xf32, #tpu.memory_space<vmem>>, %arg9: memref<1x128xf32, #tpu.memory_space<vmem>>, %arg10: memref<8x128xbf16, #tpu.memory_space<vmem>>) attributes {dimension_semantics = [#tpu.dimension_semantics<parallel>], iteration_bounds = array<i64: 1>, scalar_prefetch = 0 : i64, scratch_operands = 0 : i64, tpu.core_type = #tpu.core_type<tc>, window_params = [{transform_indices = @transform_0, window_bounds = array<i64: 8, 64>}, {transform_indices = @transform_1, window_bounds = array<i64: 8, 1>}, {pipeline_mode = #tpu.pipeline_mode<synchronous>, transform_indices = @transform_2, window_bounds = array<i64: 64, 32>}, {pipeline_mode = #tpu.pipeline_mode<synchronous>, transform_indices = @transform_3, window_bounds = array<i64: 1, 32>}, {pipeline_mode = #tpu.pipeline_mode<synchronous>, transform_indices = @transform_4, window_bounds = array<i64: 32, 32>}, {pipeline_mode = #tpu.pipeline_mode<synchronous>, transform_indices = @transform_5, window_bounds = array<i64: 1, 32>}, {pipeline_mode = #tpu.pipeline_mode<synchronous>, transform_indices = @transform_6, window_bounds = array<i64: 32, 128>}, {pipeline_mode = #tpu.pipeline_mode<synchronous>, transform_indices = @transform_7, window_bounds = array<i64: 1, 128>}, {pipeline_mode = #tpu.pipeline_mode<synchronous>, transform_indices = @transform_8, window_bounds = array<i64: 1, 128>}, {transform_indices = @transform_9, window_bounds = array<i64: 8, 128>}]} {
    %c0 = arith.constant 0 : index
    %c0_0 = arith.constant 0 : index
    %0 = vector.load %arg1[%c0, %c0_0] : memref<8x64xf32, #tpu.memory_space<vmem>>, vector<8x64xf32>
    %1 = arith.truncf %0 : vector<8x64xf32> to vector<8x64xbf16>
    %c0_1 = arith.constant 0 : index
    %c0_2 = arith.constant 0 : index
    %2 = vector.load %arg3[%c0_1, %c0_2] : memref<64x32xbf16, #tpu.memory_space<vmem>>, vector<64x32xbf16>
    %cst = arith.constant dense<0.000000e+00> : vector<8x32xf32>
    %3 = tpu.matmul %1, %2, %cst {dimension_numbers = #tpu.dot_dimension_numbers<[1], [0], [0], [1], [0, 0, 1, 1], [], []>} : vector<8x64xbf16>, vector<64x32xbf16>, vector<8x32xf32> -> vector<8x32xf32>
    %c0_3 = arith.constant 0 : index
    %c0_4 = arith.constant 0 : index
    %4 = vector.load %arg4[%c0_3, %c0_4] : memref<1x32xf32, #tpu.memory_space<vmem>>, vector<1x32xf32>
    %5 = vector.broadcast %4 : vector<1x32xf32> to vector<8x32xf32>
    %6 = arith.addf %3, %5 : vector<8x32xf32>
    %cst_5 = arith.constant 0.000000e+00 : f32
    %7 = vector.broadcast %cst_5 : f32 to vector<8x32xf32>
    %8 = arith.maximumf %6, %7 : vector<8x32xf32>
    %9 = arith.truncf %8 : vector<8x32xf32> to vector<8x32xbf16>
    %c0_6 = arith.constant 0 : index
    %c0_7 = arith.constant 0 : index
    %10 = vector.load %arg5[%c0_6, %c0_7] : memref<32x32xbf16, #tpu.memory_space<vmem>>, vector<32x32xbf16>
    %cst_8 = arith.constant dense<0.000000e+00> : vector<8x32xf32>
    %11 = tpu.matmul %9, %10, %cst_8 {dimension_numbers = #tpu.dot_dimension_numbers<[1], [0], [0], [1], [0, 0, 1, 1], [], []>} : vector<8x32xbf16>, vector<32x32xbf16>, vector<8x32xf32> -> vector<8x32xf32>
    %c0_9 = arith.constant 0 : index
    %c0_10 = arith.constant 0 : index
    %12 = vector.load %arg6[%c0_9, %c0_10] : memref<1x32xf32, #tpu.memory_space<vmem>>, vector<1x32xf32>
    %13 = vector.broadcast %12 : vector<1x32xf32> to vector<8x32xf32>
    %14 = arith.addf %11, %13 : vector<8x32xf32>
    %cst_11 = arith.constant 0.000000e+00 : f32
    %15 = vector.broadcast %cst_11 : f32 to vector<8x32xf32>
    %16 = arith.maximumf %14, %15 : vector<8x32xf32>
    %c0_12 = arith.constant 0 : index
    %c0_13 = arith.constant 0 : index
    %17 = vector.load %arg2[%c0_12, %c0_13] : memref<8x1xf32, #tpu.memory_space<vmem>>, vector<8x1xf32>
    %cst_14 = arith.constant -1.000000e+00 : f32
    %cst_15 = arith.constant 1.000000e+00 : f32
    %18 = vector.broadcast %cst_14 : f32 to vector<8x1xf32>
    %19 = arith.maximumf %18, %17 : vector<8x1xf32>
    %20 = vector.broadcast %cst_15 : f32 to vector<8x1xf32>
    %21 = arith.minimumf %20, %19 : vector<8x1xf32>
    %22 = arith.truncf %16 : vector<8x32xf32> to vector<8x32xbf16>
    %c0_16 = arith.constant 0 : index
    %c0_17 = arith.constant 0 : index
    %23 = vector.load %arg7[%c0_16, %c0_17] : memref<32x128xbf16, #tpu.memory_space<vmem>>, vector<32x128xbf16>
    %cst_18 = arith.constant dense<0.000000e+00> : vector<8x128xf32>
    %24 = tpu.matmul %22, %23, %cst_18 {dimension_numbers = #tpu.dot_dimension_numbers<[1], [0], [0], [1], [0, 0, 1, 1], [], []>} : vector<8x32xbf16>, vector<32x128xbf16>, vector<8x128xf32> -> vector<8x128xf32>
    %c0_19 = arith.constant 0 : index
    %c0_20 = arith.constant 0 : index
    %25 = vector.load %arg8[%c0_19, %c0_20] : memref<1x128xf32, #tpu.memory_space<vmem>>, vector<1x128xf32>
    %26 = vector.broadcast %21 : vector<8x1xf32> to vector<8x128xf32>
    %27 = vector.broadcast %25 : vector<1x128xf32> to vector<8x128xf32>
    %28 = arith.mulf %26, %27 : vector<8x128xf32>
    %29 = arith.addf %24, %28 : vector<8x128xf32>
    %c0_21 = arith.constant 0 : index
    %c0_22 = arith.constant 0 : index
    %30 = vector.load %arg9[%c0_21, %c0_22] : memref<1x128xf32, #tpu.memory_space<vmem>>, vector<1x128xf32>
    %31 = vector.broadcast %30 : vector<1x128xf32> to vector<8x128xf32>
    %32 = arith.addf %29, %31 : vector<8x128xf32>
    %33 = tpu.iota {dimensions = array<i32: 1>} : vector<8x128xi32>
    %c8_i32 = arith.constant 8 : i32
    %34 = vector.broadcast %c8_i32 : i32 to vector<8x128xi32>
    %35 = arith.cmpi slt, %33, %34 : vector<8x128xi32>
    %cst_23 = arith.constant 0xFF800000 : f32
    %36 = vector.broadcast %cst_23 : f32 to vector<8x128xf32>
    %37 = arith.select %35, %32, %36 : vector<8x128xi1>, vector<8x128xf32>
    %cst_24 = arith.constant dense<0xFF800000> : vector<8xf32>
    %38 = vector.multi_reduction <maximumf>, %37, %cst_24 [1] : vector<8x128xf32> to vector<8xf32>
    %39 = vector.shape_cast %38 : vector<8xf32> to vector<8x1xf32>
    %40 = vector.broadcast %39 : vector<8x1xf32> to vector<8x128xf32>
    %41 = arith.cmpf oeq, %32, %40 : vector<8x128xf32>
    %42 = arith.andi %35, %41 : vector<8x128xi1>
    %c128_i32 = arith.constant 128 : i32
    %43 = vector.broadcast %c128_i32 : i32 to vector<8x128xi32>
    %44 = arith.select %42, %33, %43 : vector<8x128xi1>, vector<8x128xi32>
    %cst_25 = arith.constant dense<2147483647> : vector<8xi32>
    %45 = vector.multi_reduction <minsi>, %44, %cst_25 [1] : vector<8x128xi32> to vector<8xi32>
    %46 = vector.shape_cast %45 : vector<8xi32> to vector<8x1xi32>
    %47 = arith.sitofp %46 : vector<8x1xi32> to vector<8x1xf32>
    %c9_i32 = arith.constant 9 : i32
    %48 = vector.broadcast %c9_i32 : i32 to vector<8x128xi32>
    %49 = arith.cmpi eq, %33, %48 : vector<8x128xi32>
    %50 = vector.shape_cast %47 : vector<8x1xf32> to vector<8x1xf32>
    %51 = vector.broadcast %50 : vector<8x1xf32> to vector<8x128xf32>
    %52 = arith.select %49, %51, %32 : vector<8x128xi1>, vector<8x128xf32>
    %53 = arith.truncf %52 : vector<8x128xf32> to vector<8x128xbf16>
    %c0_26 = arith.constant 0 : index
    %c0_27 = arith.constant 0 : index
    %54 = vector.load %arg10[%c0_26, %c0_27] : memref<8x128xbf16, #tpu.memory_space<vmem>>, vector<8x128xbf16>
    tpu.vector_store %arg10[%c0_26, %c0_27], %53 {strides = array<i32>} : memref<8x128xbf16, #tpu.memory_space<vmem>>, vector<8x128xbf16>,
    return
  }
  func.func @transform_0(%arg0: i32) -> (i32, i32) {
    %c0_i32 = arith.constant 0 : i32
    %c0_i32_0 = arith.constant 0 : i32
    return %arg0, %c0_i32 : i32, i32
  }
  func.func @transform_1(%arg0: i32) -> (i32, i32) {
    %c0_i32 = arith.constant 0 : i32
    %c0_i32_0 = arith.constant 0 : i32
    return %arg0, %c0_i32 : i32, i32
  }
  func.func @transform_2(%arg0: i32) -> (i32, i32) {
    %c0_i32 = arith.constant 0 : i32
    %c0_i32_0 = arith.constant 0 : i32
    %c0_i32_1 = arith.constant 0 : i32
    return %c0_i32, %c0_i32_0 : i32, i32
  }
  func.func @transform_3(%arg0: i32) -> (i32, i32) {
    %c0_i32 = arith.constant 0 : i32
    %c0_i32_0 = arith.constant 0 : i32
    %c0_i32_1 = arith.constant 0 : i32
    return %c0_i32, %c0_i32_0 : i32, i32
  }
  func.func @transform_4(%arg0: i32) -> (i32, i32) {
    %c0_i32 = arith.constant 0 : i32
    %c0_i32_0 = arith.constant 0 : i32
    %c0_i32_1 = arith.constant 0 : i32
    return %c0_i32, %c0_i32_0 : i32, i32
  }
  func.func @transform_5(%arg0: i32) -> (i32, i32) {
    %c0_i32 = arith.constant 0 : i32
    %c0_i32_0 = arith.constant 0 : i32
    %c0_i32_1 = arith.constant 0 : i32
    return %c0_i32, %c0_i32_0 : i32, i32
  }
  func.func @transform_6(%arg0: i32) -> (i32, i32) {
    %c0_i32 = arith.constant 0 : i32
    %c0_i32_0 = arith.constant 0 : i32
    %c0_i32_1 = arith.constant 0 : i32
    return %c0_i32, %c0_i32_0 : i32, i32
  }
  func.func @transform_7(%arg0: i32) -> (i32, i32) {
    %c0_i32 = arith.constant 0 : i32
    %c0_i32_0 = arith.constant 0 : i32
    %c0_i32_1 = arith.constant 0 : i32
    return %c0_i32, %c0_i32_0 : i32, i32
  }
  func.func @transform_8(%arg0: i32) -> (i32, i32) {
    %c0_i32 = arith.constant 0 : i32
    %c0_i32_0 = arith.constant 0 : i32
    %c0_i32_1 = arith.constant 0 : i32
    return %c0_i32, %c0_i32_0 : i32, i32
  }
  func.func @transform_9(%arg0: i32) -> (i32, i32) {
    %c0_i32 = arith.constant 0 : i32
    %c0_i32_0 = arith.constant 0 : i32
    return %arg0, %c0_i32 : i32, i32
  }
}

</mosaic_0001>

<llo_original>
// kernel: tpu_custom_call.1
$region0: #{tpu_custom_call.1}
  #allocation0 [shape = 'u32[]', space=smem, size = 0x4, offset = 0x4, fixed_abs, tag = 'smem constant byte address 0x4 - core index']
  #allocation1 [shape = 'u32[72,128]{1,0:T(1,128)}', space=vmem, size = 0x9000, scoped, tag = 'internal scratch']
  %s0 = inlined_call_operand.vmem [shape: f32[8,64], index: 0, kind: input, shape index: {}]
  %s1 = inlined_call_operand.vmem [shape: f32[8,1], index: 1, kind: input, shape index: {}]
  %s2 = inlined_call_operand.vmem [shape: bf16[64,32], index: 2, kind: input, shape index: {}]
  %s3 = inlined_call_operand.vmem [shape: f32[1,32], index: 3, kind: input, shape index: {}]
  %s4 = inlined_call_operand.vmem [shape: bf16[32,32], index: 4, kind: input, shape index: {}]
  %s5 = inlined_call_operand.vmem [shape: f32[1,32], index: 5, kind: input, shape index: {}]
  %s6 = inlined_call_operand.vmem [shape: bf16[32,128], index: 6, kind: input, shape index: {}]
  %s7 = inlined_call_operand.vmem [shape: f32[1,128], index: 7, kind: input, shape index: {}]
  %s8 = inlined_call_operand.vmem [shape: f32[1,128], index: 8, kind: input, shape index: {}]
  %s9 = inlined_call_operand.hbm [shape: bf16[8,128], index: 9, kind: output, shape index: {}]
  %s10 = sld [smem:[#allocation0]]
  $region46: #{tpu_custom_call.1} parent=0
    _
  %s12 = ssub.s32 1, %s10
  %s13 = scalar_select 0, %s12, %s10
  $region1: #{tpu_custom_call.1} parent=0
    #allocation2 [shape = 'u8[2048]{0}', space=vmem, size = 0x800, scoped, tag = 'output window, operand 0, single buffered']
    #allocation3 [shape = 's32[1]{0}', space=sflag, size = 0x4, scoped, tag = 'scoped memory for tpu_custom_call.1']
    %14 = vsyncpa [#allocation3], 0
    // Predicated region
    $region2: #{tpu_custom_call.1} parent=1 // pred_check
      _
    $region3: #{tpu_custom_call.1} parent=1 // pred_check_branch
      %16 = sbr.rel (0) target = $region5
    $region4: #{tpu_custom_call.1} parent=1 // pred_region
      _
    $region5: #{tpu_custom_call.1} parent=1 // pred_fallthru
      _
    // Predicated region
    $region6: #{tpu_custom_call.1} parent=1 // pred_check
      _
    $region7: #{tpu_custom_call.1} parent=1 // pred_check_branch
      %18 = sbr.rel (0) target = $region9
    $region8: #{tpu_custom_call.1} parent=1 // pred_region
      _
    $region9: #{tpu_custom_call.1} parent=1 // pred_fallthru
      _
    // Predicated region
    $region10: #{tpu_custom_call.1} parent=1 // pred_check
      _
    $region11: #{tpu_custom_call.1} parent=1 // pred_check_branch
      %20 = sbr.rel (0) target = $region13
    $region12: #{tpu_custom_call.1} parent=1 // pred_region
      _
    $region13: #{tpu_custom_call.1} parent=1 // pred_fallthru
      _
    // Predicated region
    $region14: #{tpu_custom_call.1} parent=1 // pred_check
      _
    $region15: #{tpu_custom_call.1} parent=1 // pred_check_branch
      %22 = sbr.rel (0) target = $region17
    $region16: #{tpu_custom_call.1} parent=1 // pred_region
      _
    $region17: #{tpu_custom_call.1} parent=1 // pred_fallthru
      _
    // Predicated region
    $region18: #{tpu_custom_call.1} parent=1 // pred_check
      _
    $region19: #{tpu_custom_call.1} parent=1 // pred_check_branch
      %24 = sbr.rel (0) target = $region21
    $region20: #{tpu_custom_call.1} parent=1 // pred_region
      _
    $region21: #{tpu_custom_call.1} parent=1 // pred_fallthru
      _
    // Predicated region
    $region22: #{tpu_custom_call.1} parent=1 // pred_check
      _
    $region23: #{tpu_custom_call.1} parent=1 // pred_check_branch
      %26 = sbr.rel (0) target = $region25
    $region24: #{tpu_custom_call.1} parent=1 // pred_region
      _
    $region25: #{tpu_custom_call.1} parent=1 // pred_fallthru
      _
    // Predicated region
    $region26: #{tpu_custom_call.1} parent=1 // pred_check
      _
    $region27: #{tpu_custom_call.1} parent=1 // pred_check_branch
      %28 = sbr.rel (0) target = $region29
    $region28: #{tpu_custom_call.1} parent=1 // pred_region
      _
    $region29: #{tpu_custom_call.1} parent=1 // pred_fallthru
      _
    // Predicated region
    $region30: #{tpu_custom_call.1} parent=1 // pred_check
      _
    $region31: #{tpu_custom_call.1} parent=1 // pred_check_branch
      %30 = sbr.rel (0) target = $region33
    $region32: #{tpu_custom_call.1} parent=1 // pred_region
      _
    $region33: #{tpu_custom_call.1} parent=1 // pred_fallthru
      _
    // Predicated region
    $region34: #{tpu_custom_call.1} parent=1 // pred_check
      _
    $region35: #{tpu_custom_call.1} parent=1 // pred_check_branch
      %32 = sbr.rel (0) target = $region37
    $region36: #{tpu_custom_call.1} parent=1 // pred_region
      _
    $region37: #{tpu_custom_call.1} parent=1 // pred_fallthru
      _
    %v34 = vld [vmem:[%s0] sm:$0xff]
    %v35 = vpack.c.bf16 %v34, %v34
    %v36 = vld [vmem:[%s2] sm:$0xf]
    %v37 = vld [vmem:[%s2 + $0x4] sm:$0xf]
    %v38 = vld [vmem:[%s2 + $0x8] sm:$0xf]
    %v39 = vld [vmem:[%s2 + $0xc] sm:$0xf]
    %v40 = vld [vmem:[%s2 + $0x10] sm:$0xf]
    %v41 = vld [vmem:[%s2 + $0x14] sm:$0xf]
    %v42 = vld [vmem:[%s2 + $0x18] sm:$0xf]
    %v43 = vld [vmem:[%s2 + $0x1c] sm:$0xf]
    %v44 = vld [vmem:[%s3] sm:$0x1]
    %v46 = vperm.slane %v44, 0
    %v56 = vunpack.c.l.b16 %v36
    %v57 = vunpack.c.l.b16 %v37
    %v58 = vunpack.c.l.b16 %v38
    %v59 = vunpack.c.l.b16 %v39
    %v60 = vunpack.c.l.b16 %v40
    %v61 = vunpack.c.l.b16 %v41
    %v62 = vunpack.c.l.b16 %v42
    %v63 = vunpack.c.l.b16 %v43
    %v64 = vpack.c.b16 %v57, %v56
    %v65 = vpack.c.b16 %v59, %v58
    %v66 = vpack.c.b16 %v61, %v60
    %v67 = vpack.c.b16 %v63, %v62
    %vm72 = vcmask 523264
    %v74 = vsel %vm72, %v35, 0
    %76 = vmatpush.bf16.msra.mxu0 0
    %77 = vmatpush.bf16.msra.mxu0 0
    %78 = vmatpush.bf16.msra.mxu0 0
    %79 = vmatpush.bf16.msra.mxu0 0
    %80 = vmatpush.bf16.msra.mxu0 %v67
    %81 = vmatpush.bf16.msra.mxu0 %v66
    %82 = vmatpush.bf16.msra.mxu0 %v65
    %83 = vmatpush.bf16.msra.mxu0 %v64
    %84 = vmatmul.bf16.gmra.mxu0 %v74
    %v85 = vpop.f32.mrf.mxu0
    %v86 = vadd.f32 %v46, %v85
    %v87 = vpop.f32.mrf.mxu0
    %88 = vdwg.mxu0
    %v89 = vmax.f32 %v86, 0.0
    %v90 = vpack.c.bf16 %v89, %v89
    %v91 = vld [vmem:[%s4] sm:$0xf]
    %v92 = vld [vmem:[%s4 + $0x4] sm:$0xf]
    %v93 = vld [vmem:[%s4 + $0x8] sm:$0xf]
    %v94 = vld [vmem:[%s4 + $0xc] sm:$0xf]
    %v95 = vld [vmem:[%s5] sm:$0x1]
    %v97 = vperm.slane %v95, 0
    %v103 = vunpack.c.l.b16 %v91
    %v104 = vunpack.c.l.b16 %v92
    %v105 = vunpack.c.l.b16 %v93
    %v106 = vunpack.c.l.b16 %v94
    %v107 = vpack.c.b16 %v104, %v103
    %v108 = vpack.c.b16 %v106, %v105
    %vm111 = vcmask 261120
    %v113 = vsel %vm111, %v90, 0
    %115 = vmatpush.bf16.msra.mxu0 0
    %116 = vmatpush.bf16.msra.mxu0 0
    %117 = vmatpush.bf16.msra.mxu0 0
    %118 = vmatpush.bf16.msra.mxu0 0
    %119 = vmatpush.bf16.msra.mxu0 0
    %120 = vmatpush.bf16.msra.mxu0 0
    %121 = vmatpush.bf16.msra.mxu0 %v108
    %122 = vmatpush.bf16.msra.mxu0 %v107
    %123 = vmatmul.bf16.gmra.mxu0 %v113
    %v124 = vpop.f32.mrf.mxu0
    %v125 = vadd.f32 %v97, %v124
    %v126 = vpop.f32.mrf.mxu0
    %127 = vdwg.mxu0
    %v128 = vmax.f32 %v125, 0.0
    %v129 = vld [vmem:[%s1] sm:$0xff]
    %v130 = vmax.f32 %v129, -1.0
    %v131 = vmin.f32 %v130, 1.0
    %v132 = vpack.c.bf16 %v128, %v128
    %v133 = vld [vmem:[%s6] sm:$0xf]
    %v134 = vld [vmem:[%s6 + $0x4] sm:$0xf]
    %v135 = vld [vmem:[%s6 + $0x8] sm:$0xf]
    %v136 = vld [vmem:[%s6 + $0xc] sm:$0xf]
    %v137 = vld [vmem:[%s7] sm:$0x1]
    %139 = vset.pattern.permute.xlu0 0
    %140 = vperm.xlu0 %139, %v131
    %v141 = vpop.permute.xlu0 %140
    %v144 = vperm.slane %v137, 0
    %v146 = vmul.f32 %v141, %v144
    %v151 = vunpack.c.l.b16 %v133
    %v152 = vunpack.c.l.b16 %v134
    %v153 = vunpack.c.l.b16 %v135
    %v154 = vunpack.c.l.b16 %v136
    %v155 = vpack.c.b16 %v152, %v151
    %v156 = vpack.c.b16 %v154, %v153
    %v160 = vsel %vm111, %v132, 0
    %162 = vmatpush.bf16.msra.mxu0 0
    %163 = vmatpush.bf16.msra.mxu0 0
    %164 = vmatpush.bf16.msra.mxu0 0
    %165 = vmatpush.bf16.msra.mxu0 0
    %166 = vmatpush.bf16.msra.mxu0 0
    %167 = vmatpush.bf16.msra.mxu0 0
    %168 = vmatpush.bf16.msra.mxu0 %v156
    %169 = vmatpush.bf16.msra.mxu0 %v155
    %170 = vmatmul.bf16.gmra.mxu0 %v160
    %v171 = vpop.f32.mrf.mxu0
    %v172 = vadd.f32 %v146, %v171
    %v173 = vpop.f32.mrf.mxu0
    %174 = vdwg.mxu0
    %v175 = vld [vmem:[%s8] sm:$0x1]
    %v177 = vperm.slane %v175, 0
    %v179 = vadd.f32 %v172, %v177
    %v180 = vlaneseq
    %v181 = vand.u32 %v180, 127
    %vm182 = vcmp.lt.s32.totalorder %v181, 8
    %v183 = vsel %vm182, %v179, -inf
    %184 = vmax.xlane.f32.xlu0 %v183
    %v185 = vpop.xlane.xlu0 %184
    %vm186 = vcmp.eq.f32.partialorder %v179, %v185
    %vm187 = vmand %vm182, %vm186
    %v188 = vsel %vm187, %v181, 128
    %v189 = vand.u32 %v188, 65535
    %v190 = vshra.s32 %v188, 16
    %v191 = vcvt.s32.f32 %v189
    %v192 = vcvt.s32.f32 %v190
    %193 = vmin.xlane.f32.xlu0 %v192
    %v194 = vpop.xlane.xlu0 %193
    %vm195 = vcmp.eq.f32.partialorder %v192, %v194
    %v196 = vsel %vm195, %v191, inf
    %197 = vmin.xlane.f32.xlu0 %v196
    %v198 = vpop.xlane.xlu0 %197
    %v199 = vcvt.f32.s32 %v198
    %v200 = vcvt.f32.s32 %v194
    %v201 = vshll.u32 %v200, 16
    %v202 = vadd.s32 %v201, %v199
    %v203 = vcvt.s32.f32 %v202
    %vm204 = vcmp.eq.s32.totalorder %v181, 9
    %v205 = vsel %vm204, %v203, %v179
    %v206 = vpack.c.bf16 %v205, %v205
    %207 = vst [vmem:[#allocation2] sm:$0xf] %v206
    // Predicated region
    $region38: #{tpu_custom_call.1} parent=1 // pred_check
      _
    $region39: #{tpu_custom_call.1} parent=1 // pred_check_branch
      %209 = sbr.rel (0) target = $region41
    $region40: #{tpu_custom_call.1} parent=1 // pred_region
      %211 = vsyncadd [#allocation3], 0
      %s213 = sshll.u32 [#allocation2], 4
      %s214 = int_to_ptr.vmem [resolvable:$true] %s213
      %s215 = sshll.u32 %s9, 4
      %s216 = int_to_ptr.hbm [resolvable:$true] %s215
      %218 = dma.vmem_to_hbm [thread:$0]  %s214, 64, %s216, [#allocation3]
    $region41: #{tpu_custom_call.1} parent=1 // pred_fallthru
      _
    // Predicated region
    $region42: #{tpu_custom_call.1} parent=1 // pred_check
      _
    $region43: #{tpu_custom_call.1} parent=1 // pred_check_branch
      %220 = sbr.rel (0) target = $region45
    $region44: #{tpu_custom_call.1} parent=1 // pred_region
      %222 = dma.done [#allocation3], 64
    $region45: #{tpu_custom_call.1} parent=1 // pred_fallthru
      _
    %223 = vsyncpa [#allocation3], 1

// kernel: tpu_custom_call.1
$region0: #{tpu_custom_call.1}
  #allocation0 [shape = 'u32[]', space=smem, size = 0x4, offset = 0x4, fixed_abs, tag = 'smem constant byte address 0x4 - core index']
  #allocation1 [shape = 'u32[72,128]{1,0:T(1,128)}', space=vmem, size = 0x9000, scoped, tag = 'internal scratch']
  %s0 = inlined_call_operand.vmem [shape: f32[8,64], index: 0, kind: input, shape index: {}]
  %s1 = inlined_call_operand.vmem [shape: f32[8,1], index: 1, kind: input, shape index: {}]
  %s2 = inlined_call_operand.vmem [shape: bf16[64,32], index: 2, kind: input, shape index: {}]
  %s3 = inlined_call_operand.vmem [shape: f32[1,32], index: 3, kind: input, shape index: {}]
  %s4 = inlined_call_operand.vmem [shape: bf16[32,32], index: 4, kind: input, shape index: {}]
  %s5 = inlined_call_operand.vmem [shape: f32[1,32], index: 5, kind: input, shape index: {}]
  %s6 = inlined_call_operand.vmem [shape: bf16[32,128], index: 6, kind: input, shape index: {}]
  %s7 = inlined_call_operand.vmem [shape: f32[1,128], index: 7, kind: input, shape index: {}]
  %s8 = inlined_call_operand.vmem [shape: f32[1,128], index: 8, kind: input, shape index: {}]
  %s9 = inlined_call_operand.hbm [shape: bf16[8,128], index: 9, kind: output, shape index: {}]
  %s10 = sld [smem:[#allocation0]]
  $region46: #{tpu_custom_call.1} parent=0
    _
  %s12 = ssub.s32 1, %s10
  %s13 = scalar_select 0, %s12, %s10
  $region1: #{tpu_custom_call.1} parent=0
    #allocation2 [shape = 'u8[2048]{0}', space=vmem, size = 0x800, scoped, tag = 'output window, operand 0, single buffered']
    #allocation3 [shape = 's32[1]{0}', space=sflag, size = 0x4, scoped, tag = 'scoped memory for tpu_custom_call.1']
    %14 = vsyncpa [#allocation3], 0
    // Predicated region
    $region2: #{tpu_custom_call.1} parent=1 // pred_check
      _
    $region3: #{tpu_custom_call.1} parent=1 // pred_check_branch
      %16 = sbr.rel (0) target = $region5
    $region4: #{tpu_custom_call.1} parent=1 // pred_region
      _
    $region5: #{tpu_custom_call.1} parent=1 // pred_fallthru
      _
    // Predicated region
    $region6: #{tpu_custom_call.1} parent=1 // pred_check
      _
    $region7: #{tpu_custom_call.1} parent=1 // pred_check_branch
      %18 = sbr.rel (0) target = $region9
    $region8: #{tpu_custom_call.1} parent=1 // pred_region
      _
    $region9: #{tpu_custom_call.1} parent=1 // pred_fallthru
      _
    // Predicated region
    $region10: #{tpu_custom_call.1} parent=1 // pred_check
      _
    $region11: #{tpu_custom_call.1} parent=1 // pred_check_branch
      %20 = sbr.rel (0) target = $region13
    $region12: #{tpu_custom_call.1} parent=1 // pred_region
      _
    $region13: #{tpu_custom_call.1} parent=1 // pred_fallthru
      _
    // Predicated region
    $region14: #{tpu_custom_call.1} parent=1 // pred_check
      _
    $region15: #{tpu_custom_call.1} parent=1 // pred_check_branch
      %22 = sbr.rel (0) target = $region17
    $region16: #{tpu_custom_call.1} parent=1 // pred_region
      _
    $region17: #{tpu_custom_call.1} parent=1 // pred_fallthru
      _
    // Predicated region
    $region18: #{tpu_custom_call.1} parent=1 // pred_check
      _
    $region19: #{tpu_custom_call.1} parent=1 // pred_check_branch
      %24 = sbr.rel (0) target = $region21
    $region20: #{tpu_custom_call.1} parent=1 // pred_region
      _
    $region21: #{tpu_custom_call.1} parent=1 // pred_fallthru
      _
    // Predicated region
    $region22: #{tpu_custom_call.1} parent=1 // pred_check
      _
    $region23: #{tpu_custom_call.1} parent=1 // pred_check_branch
      %26 = sbr.rel (0) target = $region25
    $region24: #{tpu_custom_call.1} parent=1 // pred_region
      _
    $region25: #{tpu_custom_call.1} parent=1 // pred_fallthru
      _
    // Predicated region
    $region26: #{tpu_custom_call.1} parent=1 // pred_check
      _
    $region27: #{tpu_custom_call.1} parent=1 // pred_check_branch
      %28 = sbr.rel (0) target = $region29
    $region28: #{tpu_custom_call.1} parent=1 // pred_region
      _
    $region29: #{tpu_custom_call.1} parent=1 // pred_fallthru
      _
    // Predicated region
    $region30: #{tpu_custom_call.1} parent=1 // pred_check
      _
    $region31: #{tpu_custom_call.1} parent=1 // pred_check_branch
      %30 = sbr.rel (0) target = $region33
    $region32: #{tpu_custom_call.1} parent=1 // pred_region
      _
    $region33: #{tpu_custom_call.1} parent=1 // pred_fallthru
      _
    // Predicated region
    $region34: #{tpu_custom_call.1} parent=1 // pred_check
      _
    $region35: #{tpu_custom_call.1} parent=1 // pred_check_branch
      %32 = sbr.rel (0) target = $region37
    $region36: #{tpu_custom_call.1} parent=1 // pred_region
      _
    $region37: #{tpu_custom_call.1} parent=1 // pred_fallthru
      _
    %v34 = vld [vmem:[%s0] sm:$0xff]
    %v35 = vpack.c.bf16 %v34, %v34
    %v36 = vld [vmem:[%s2] sm:$0xf]
    %v37 = vld [vmem:[%s2 + $0x4] sm:$0xf]
    %v38 = vld [vmem:[%s2 + $0x8] sm:$0xf]
    %v39 = vld [vmem:[%s2 + $0xc] sm:$0xf]
    %v40 = vld [vmem:[%s2 + $0x10] sm:$0xf]
    %v41 = vld [vmem:[%s2 + $0x14] sm:$0xf]
    %v42 = vld [vmem:[%s2 + $0x18] sm:$0xf]
    %v43 = vld [vmem:[%s2 + $0x1c] sm:$0xf]
    %v44 = vld [vmem:[%s3] sm:$0x1]
    %v46 = vperm.slane %v44, 0
    %v56 = vunpack.c.l.b16 %v36
    %v57 = vunpack.c.l.b16 %v37
    %v58 = vunpack.c.l.b16 %v38
    %v59 = vunpack.c.l.b16 %v39
    %v60 = vunpack.c.l.b16 %v40
    %v61 = vunpack.c.l.b16 %v41
    %v62 = vunpack.c.l.b16 %v42
    %v63 = vunpack.c.l.b16 %v43
    %v64 = vpack.c.b16 %v57, %v56
    %v65 = vpack.c.b16 %v59, %v58
    %v66 = vpack.c.b16 %v61, %v60
    %v67 = vpack.c.b16 %v63, %v62
    %vm72 = vcmask 523264
    %v74 = vsel %vm72, %v35, 0
    %76 = vmatpush.bf16.msra.mxu0 0
    %77 = vmatpush.bf16.msra.mxu0 0
    %78 = vmatpush.bf16.msra.mxu0 0
    %79 = vmatpush.bf16.msra.mxu0 0
    %80 = vmatpush.bf16.msra.mxu0 %v67
    %81 = vmatpush.bf16.msra.mxu0 %v66
    %82 = vmatpush.bf16.msra.mxu0 %v65
    %83 = vmatpush.bf16.msra.mxu0 %v64
    %84 = vmatmul.bf16.gmra.mxu0 %v74
    %v85 = vpop.f32.mrf.mxu0
    %v86 = vadd.f32 %v46, %v85
    %v87 = vpop.f32.mrf.mxu0
    %88 = vdwg.mxu0
    %v89 = vmax.f32 %v86, 0.0
    %v90 = vpack.c.bf16 %v89, %v89
    %v91 = vld [vmem:[%s4] sm:$0xf]
    %v92 = vld [vmem:[%s4 + $0x4] sm:$0xf]
    %v93 = vld [vmem:[%s4 + $0x8] sm:$0xf]
    %v94 = vld [vmem:[%s4 + $0xc] sm:$0xf]
    %v95 = vld [vmem:[%s5] sm:$0x1]
    %v97 = vperm.slane %v95, 0
    %v103 = vunpack.c.l.b16 %v91
    %v104 = vunpack.c.l.b16 %v92
    %v105 = vunpack.c.l.b16 %v93
    %v106 = vunpack.c.l.b16 %v94
    %v107 = vpack.c.b16 %v104, %v103
    %v108 = vpack.c.b16 %v106, %v105
    %vm111 = vcmask 261120
    %v113 = vsel %vm111, %v90, 0
    %115 = vmatpush.bf16.msra.mxu0 0
    %116 = vmatpush.bf16.msra.mxu0 0
    %117 = vmatpush.bf16.msra.mxu0 0
    %118 = vmatpush.bf16.msra.mxu0 0
    %119 = vmatpush.bf16.msra.mxu0 0
    %120 = vmatpush.bf16.msra.mxu0 0
    %121 = vmatpush.bf16.msra.mxu0 %v108
    %122 = vmatpush.bf16.msra.mxu0 %v107
    %123 = vmatmul.bf16.gmra.mxu0 %v113
    %v124 = vpop.f32.mrf.mxu0
    %v125 = vadd.f32 %v97, %v124
    %v126 = vpop.f32.mrf.mxu0
    %127 = vdwg.mxu0
    %v128 = vmax.f32 %v125, 0.0
    %v129 = vld [vmem:[%s1] sm:$0xff]
    %v130 = vmax.f32 %v129, -1.0
    %v131 = vmin.f32 %v130, 1.0
    %v132 = vpack.c.bf16 %v128, %v128
    %v133 = vld [vmem:[%s6] sm:$0xf]
    %v134 = vld [vmem:[%s6 + $0x4] sm:$0xf]
    %v135 = vld [vmem:[%s6 + $0x8] sm:$0xf]
    %v136 = vld [vmem:[%s6 + $0xc] sm:$0xf]
    %v137 = vld [vmem:[%s7] sm:$0x1]
    %139 = vset.pattern.permute.xlu0 0
    %140 = vperm.xlu0 %139, %v131
    %v141 = vpop.permute.xlu0 %140
    %v144 = vperm.slane %v137, 0
    %v146 = vmul.f32 %v141, %v144
    %v151 = vunpack.c.l.b16 %v133
    %v152 = vunpack.c.l.b16 %v134
    %v153 = vunpack.c.l.b16 %v135
    %v154 = vunpack.c.l.b16 %v136
    %v155 = vpack.c.b16 %v152, %v151
    %v156 = vpack.c.b16 %v154, %v153
    %v160 = vsel %vm111, %v132, 0
    %162 = vmatpush.bf16.msra.mxu0 0
    %163 = vmatpush.bf16.msra.mxu0 0
    %164 = vmatpush.bf16.msra.mxu0 0
    %165 = vmatpush.bf16.msra.mxu0 0
    %166 = vmatpush.bf16.msra.mxu0 0
    %167 = vmatpush.bf16.msra.mxu0 0
    %168 = vmatpush.bf16.msra.mxu0 %v156
    %169 = vmatpush.bf16.msra.mxu0 %v155
    %170 = vmatmul.bf16.gmra.mxu0 %v160
    %v171 = vpop.f32.mrf.mxu0
    %v172 = vadd.f32 %v146, %v171
    %v173 = vpop.f32.mrf.mxu0
    %174 = vdwg.mxu0
    %v175 = vld [vmem:[%s8] sm:$0x1]
    %v177 = vperm.slane %v175, 0
    %v179 = vadd.f32 %v172, %v177
    %v180 = vlaneseq
    %v181 = vand.u32 %v180, 127
    %vm182 = vcmp.lt.s32.totalorder %v181, 8
    %v183 = vsel %vm182, %v179, -inf
    %184 = vmax.xlane.f32.xlu0 %v183
    %v185 = vpop.xlane.xlu0 %184
    %vm186 = vcmp.eq.f32.partialorder %v179, %v185
    %vm187 = vmand %vm182, %vm186
    %v188 = vsel %vm187, %v181, 128
    %v189 = vand.u32 %v188, 65535
    %v190 = vshra.s32 %v188, 16
    %v191 = vcvt.s32.f32 %v189
    %v192 = vcvt.s32.f32 %v190
    %193 = vmin.xlane.f32.xlu0 %v192
    %v194 = vpop.xlane.xlu0 %193
    %vm195 = vcmp.eq.f32.partialorder %v192, %v194
    %v196 = vsel %vm195, %v191, inf
    %197 = vmin.xlane.f32.xlu0 %v196
    %v198 = vpop.xlane.xlu0 %197
    %v199 = vcvt.f32.s32 %v198
    %v200 = vcvt.f32.s32 %v194
    %v201 = vshll.u32 %v200, 16
    %v202 = vadd.s32 %v201, %v199
    %v203 = vcvt.s32.f32 %v202
    %vm204 = vcmp.eq.s32.totalorder %v181, 9
    %v205 = vsel %vm204, %v203, %v179
    %v206 = vpack.c.bf16 %v205, %v205
    %207 = vst [vmem:[#allocation2] sm:$0xf] %v206
    // Predicated region
    $region38: #{tpu_custom_call.1} parent=1 // pred_check
      _
    $region39: #{tpu_custom_call.1} parent=1 // pred_check_branch
      %209 = sbr.rel (0) target = $region41
    $region40: #{tpu_custom_call.1} parent=1 // pred_region
      %211 = vsyncadd [#allocation3], 0
      %s213 = sshll.u32 [#allocation2], 4
      %s214 = int_to_ptr.vmem [resolvable:$true] %s213
      %s215 = sshll.u32 %s9, 4
      %s216 = int_to_ptr.hbm [resolvable:$true] %s215
      %218 = dma.vmem_to_hbm [thread:$0]  %s214, 64, %s216, [#allocation3]
    $region41: #{tpu_custom_call.1} parent=1 // pred_fallthru
      _
    // Predicated region
    $region42: #{tpu_custom_call.1} parent=1 // pred_check
      _
    $region43: #{tpu_custom_call.1} parent=1 // pred_check_branch
      %220 = sbr.rel (0) target = $region45
    $region44: #{tpu_custom_call.1} parent=1 // pred_region
      %222 = dma.done [#allocation3], 64
    $region45: #{tpu_custom_call.1} parent=1 // pred_fallthru
      _
    %223 = vsyncpa [#allocation3], 1

</llo_original>
